<compile_context>
chip_gen: v6e
topology: v6e:2x2x1
jax: 0.10.0
libtpu: 0.0.40
codegen_flags: <defaults>
</compile_context>

<pallas_src>
import functools

import jax
import jax.numpy as jnp
from jax.experimental import pallas as pl
from jax.experimental.pallas import tpu as pltpu


def _round_up(x, m):
    return ((x + m - 1) // m) * m


def _poly_cutoff_kernel(d_ref, o_ref, *, p):
    # Coefficients are static (p is a static python int).
    c0 = jnp.float32(0.5 * (p + 1) * (p + 2))
    c1 = jnp.float32(p * (p + 2))
    c2 = jnp.float32(0.5 * p * (p + 1))

    # Compute in f32 on the VPU regardless of I/O dtype.
    d = d_ref[...].astype(jnp.float32)

    # d^p via repeated squaring (static exponent); no ones_like seed.
    if p == 0:
        dp = jnp.ones_like(d)
    else:
        dp = None
        base = d
        e = p
        while e > 0:
            if e & 1:
                dp = base if dp is None else dp * base
            e >>= 1
            if e:
                base = base * base

    # y = 1 - c0*d^p + c1*d^(p+1) - c2*d^(p+2)
    #   = 1 - d^p * (c0 - d*(c1 - c2*d))          (Horner on the tail)
    y = 1.0 - dp * (c0 - d * (c1 - c2 * d))
    o_ref[...] = y.astype(o_ref.dtype)


def polynomial_cutoff(dist, p=9, *, lane=512, target_block_rows=1024):
    """Pallas TPU implementation of PolynomialCutoff.forward.

    Accepts `dist` of any shape / any float dtype.  Flattens to a lane-dense
    [M, lane] slab (lane multiple of 128), pads the ragged tail, runs a
    block-tiled elementwise kernel, and restores the original shape.

    Args:
      dist: float array of scaled interatomic distances (any shape).
      p:    static int polynomial degree (default 9, as in NewtonNet).
      lane: lane width of the internal 2-D slab (multiple of 128).
      target_block_rows: rows per block; 1024 x 512 f32 = 2 MiB blocks.
    """
    assert lane % 128 == 0, "lane width must be a multiple of 128"
    orig_shape = dist.shape
    total = int(dist.size)
    flat = dist.reshape(-1)

    # Rows of the lane-dense slab and block sizing.
    m = -(-total // lane)  # cdiv
    if m <= target_block_rows:
        block_rows = _round_up(max(m, 1), 8)
        padded_m = block_rows
    else:
        block_rows = target_block_rows
        padded_m = _round_up(m, block_rows)

    padded_total = padded_m * lane
    if padded_total != total:
        flat = jnp.pad(flat, (0, padded_total - total))
    x2d = flat.reshape(padded_m, lane)

    kernel = functools.partial(_poly_cutoff_kernel, p=p)
    out2d = pl.pallas_call(
        kernel,
        out_shape=jax.ShapeDtypeStruct((padded_m, lane), dist.dtype),
        grid=(padded_m // block_rows,),
        in_specs=[pl.BlockSpec((block_rows, lane), lambda i: (i, 0))],
        out_specs=pl.BlockSpec((block_rows, lane), lambda i: (i, 0)),
        compiler_params=pltpu.CompilerParams(
            dimension_semantics=("parallel",)),
    )(x2d)

    return out2d.reshape(-1)[:total].reshape(orig_shape)


def polynomial_cutoff_ref(dist, p=9):
    """Pure-JAX reference (mirrors the PyTorch forward exactly)."""
    return (1.0
            - 0.5 * (p + 1) * (p + 2) * dist ** p
            + p * (p + 2) * dist ** (p + 1)
            - 0.5 * p * (p + 1) * dist ** (p + 2))


if __name__ == "__main__":
    key = jax.random.PRNGKey(0)
    p = 9

    # Small 4-D input of scaled interatomic distances in [0, 1].
    dist = jax.random.uniform(key, (2, 4, 16, 16), dtype=jnp.float32)
    out = jax.block_until_ready(polynomial_cutoff(dist, p=p))
    ref = polynomial_cutoff_ref(dist, p=p)
    assert out.shape == dist.shape and out.dtype == dist.dtype
    assert jnp.allclose(out, ref, atol=1e-5, rtol=1e-5), "mismatch vs reference"

    # Ragged shape (exercises the pad/reshape path).
    key2 = jax.random.fold_in(key, 1)
    dist2 = jax.random.uniform(key2, (5, 37), dtype=jnp.float32)
    out2 = jax.block_until_ready(polynomial_cutoff(dist2, p=p))
    ref2 = polynomial_cutoff_ref(dist2, p=p)
    assert out2.shape == dist2.shape
    assert jnp.allclose(out2, ref2, atol=1e-5, rtol=1e-5), "ragged mismatch"

    # Sanity: y(0)=1, y(1)=0.
    edge = jax.block_until_ready(
        polynomial_cutoff(
            jnp.concatenate([jnp.zeros((8, 128), jnp.float32),
                             jnp.ones((8, 128), jnp.float32)], axis=0),
            p=p))
    assert jnp.allclose(edge[:8], 1.0, atol=1e-5)
    assert jnp.allclose(edge[8:], 0.0, atol=1e-5)

    print("KERNEL_OK")
</pallas_src>

<mosaic_0001>
module attributes {stable_mosaic.version = 11 : i64} {
  func.func @_poly_cutoff_kernel(%arg0: i32, %arg1: memref<8x512xf32, #tpu.memory_space<vmem>>, %arg2: memref<8x512xf32, #tpu.memory_space<vmem>>) attributes {dimension_semantics = [#tpu.dimension_semantics<parallel>], iteration_bounds = array<i64: 1>, scalar_prefetch = 0 : i64, scratch_operands = 0 : i64, tpu.core_type = #tpu.core_type<tc>, window_params = [{transform_indices = @transform_0, window_bounds = array<i64: 8, 512>}, {transform_indices = @transform_1, window_bounds = array<i64: 8, 512>}]} {
    %c0 = arith.constant 0 : index
    %c0_0 = arith.constant 0 : index
    %0 = vector.load %arg1[%c0, %c0_0] : memref<8x512xf32, #tpu.memory_space<vmem>>, vector<8x512xf32>
    %1 = arith.mulf %0, %0 : vector<8x512xf32>
    %2 = arith.mulf %1, %1 : vector<8x512xf32>
    %3 = arith.mulf %2, %2 : vector<8x512xf32>
    %4 = arith.mulf %0, %3 : vector<8x512xf32>
    %cst = arith.constant 4.500000e+01 : f32
    %5 = vector.broadcast %cst : f32 to vector<8x512xf32>
    %6 = arith.mulf %5, %0 : vector<8x512xf32>
    %cst_1 = arith.constant 9.900000e+01 : f32
    %7 = vector.broadcast %cst_1 : f32 to vector<8x512xf32>
    %8 = arith.subf %7, %6 : vector<8x512xf32>
    %9 = arith.mulf %0, %8 : vector<8x512xf32>
    %cst_2 = arith.constant 5.500000e+01 : f32
    %10 = vector.broadcast %cst_2 : f32 to vector<8x512xf32>
    %11 = arith.subf %10, %9 : vector<8x512xf32>
    %12 = arith.mulf %4, %11 : vector<8x512xf32>
    %cst_3 = arith.constant 1.000000e+00 : f32
    %13 = vector.broadcast %cst_3 : f32 to vector<8x512xf32>
    %14 = arith.subf %13, %12 : vector<8x512xf32>
    %c0_4 = arith.constant 0 : index
    %c0_5 = arith.constant 0 : index
    %15 = vector.load %arg2[%c0_4, %c0_5] : memref<8x512xf32, #tpu.memory_space<vmem>>, vector<8x512xf32>
    tpu.vector_store %arg2[%c0_4, %c0_5], %14 {strides = array<i32>} : memref<8x512xf32, #tpu.memory_space<vmem>>, vector<8x512xf32>,
    return
  }
  func.func @transform_0(%arg0: i32) -> (i32, i32) {
    %c0_i32 = arith.constant 0 : i32
    %c0_i32_0 = arith.constant 0 : i32
    return %arg0, %c0_i32 : i32, i32
  }
  func.func @transform_1(%arg0: i32) -> (i32, i32) {
    %c0_i32 = arith.constant 0 : i32
    %c0_i32_0 = arith.constant 0 : i32
    return %arg0, %c0_i32 : i32, i32
  }
}

</mosaic_0001>

<llo_original>
// kernel: tpu_custom_call.1
$region0: #{tpu_custom_call.1}
  #allocation0 [shape = 'u32[]', space=smem, size = 0x4, offset = 0x4, fixed_abs, tag = 'smem constant byte address 0x4 - core index']
  #allocation1 [shape = 'u32[144,128]{1,0:T(1,128)}', space=vmem, size = 0x12000, scoped, tag = 'internal scratch']
  %s0 = inlined_call_operand.hbm [shape: f32[8,512], index: 0, kind: input, shape index: {}]
  %s1 = inlined_call_operand.hbm [shape: f32[8,512], index: 1, kind: output, shape index: {}]
  %s2 = sld [smem:[#allocation0]]
  $region18: #{tpu_custom_call.1} parent=0
    _
  %s4 = ssub.s32 1, %s2
  %s5 = scalar_select 0, %s4, %s2
  $region1: #{tpu_custom_call.1} parent=0
    #allocation2 [shape = 'u8[16384]{0}', space=vmem, size = 0x4000, scoped, tag = 'input window, operand 0, single buffered']
    #allocation3 [shape = 's32[1]{0}', space=sflag, size = 0x4, scoped, tag = 'scoped memory for tpu_custom_call.1']
    #allocation4 [shape = 's32[1]{0}', space=sflag, size = 0x4, scoped, tag = 'scoped memory for tpu_custom_call.1']
    #allocation5 [shape = 'u8[16384]{0}', space=vmem, size = 0x4000, scoped, tag = 'output window, operand 0, single buffered']
    %6 = vsyncpa [#allocation3], 0
    %7 = vsyncpa [#allocation4], 0
    // Predicated region
    $region2: #{tpu_custom_call.1} parent=1 // pred_check
      _
    $region3: #{tpu_custom_call.1} parent=1 // pred_check_branch
      %9 = sbr.rel (0) target = $region5
    $region4: #{tpu_custom_call.1} parent=1 // pred_region
      %s11 = ssub.s32 512, 512
      %12 = vsyncadd [#allocation3], %s11
      %s14 = sshll.u32 [#allocation2], 4
      %s15 = int_to_ptr.vmem [resolvable:$true] %s14
      %17 = dma.hbm_to_vmem [thread:$0]  %s0, 512, %s15, [#allocation3]
    $region5: #{tpu_custom_call.1} parent=1 // pred_fallthru
      _
    // Predicated region
    $region6: #{tpu_custom_call.1} parent=1 // pred_check
      _
    $region7: #{tpu_custom_call.1} parent=1 // pred_check_branch
      %19 = sbr.rel (0) target = $region9
    $region8: #{tpu_custom_call.1} parent=1 // pred_region
      %20 = dma.done [#allocation3], 512
    $region9: #{tpu_custom_call.1} parent=1 // pred_fallthru
      _
    %v21 = vld [vmem:[#allocation2] sm:$0xff]
    %v22 = vld [vmem:[#allocation2 + $0x8] sm:$0xff]
    %v23 = vld [vmem:[#allocation2 + $0x10] sm:$0xff]
    %v24 = vld [vmem:[#allocation2 + $0x18] sm:$0xff]
    %v25 = vmul.f32 %v21, %v21
    %v26 = vmul.f32 %v22, %v22
    %v27 = vmul.f32 %v23, %v23
    %v28 = vmul.f32 %v24, %v24
    %v29 = vmul.f32 %v25, %v25
    %v30 = vmul.f32 %v26, %v26
    %v31 = vmul.f32 %v27, %v27
    %v32 = vmul.f32 %v28, %v28
    %v33 = vmul.f32 %v29, %v29
    %v34 = vmul.f32 %v30, %v30
    %v35 = vmul.f32 %v31, %v31
    %v36 = vmul.f32 %v32, %v32
    %v37 = vmul.f32 %v21, %v33
    %v38 = vmul.f32 %v22, %v34
    %v39 = vmul.f32 %v23, %v35
    %v40 = vmul.f32 %v24, %v36
    %v41 = vmul.f32 %v21, 45.0
    %v42 = vmul.f32 %v22, 45.0
    %v43 = vmul.f32 %v23, 45.0
    %v44 = vmul.f32 %v24, 45.0
    %v45 = vsub.f32 99.0, %v41
    %v46 = vsub.f32 99.0, %v42
    %v47 = vsub.f32 99.0, %v43
    %v48 = vsub.f32 99.0, %v44
    %v49 = vmul.f32 %v21, %v45
    %v50 = vmul.f32 %v22, %v46
    %v51 = vmul.f32 %v23, %v47
    %v52 = vmul.f32 %v24, %v48
    %v53 = vsub.f32 55.0, %v49
    %v54 = vsub.f32 55.0, %v50
    %v55 = vsub.f32 55.0, %v51
    %v56 = vsub.f32 55.0, %v52
    %v57 = vmul.f32 %v37, %v53
    %v58 = vmul.f32 %v38, %v54
    %v59 = vmul.f32 %v39, %v55
    %v60 = vmul.f32 %v40, %v56
    %v61 = vsub.f32 1.0, %v57
    %v62 = vsub.f32 1.0, %v58
    %v63 = vsub.f32 1.0, %v59
    %v64 = vsub.f32 1.0, %v60
    %65 = vst [vmem:[#allocation5] sm:$0xff] %v61
    %66 = vst [vmem:[#allocation5 + $0x8] sm:$0xff] %v62
    %67 = vst [vmem:[#allocation5 + $0x10] sm:$0xff] %v63
    %68 = vst [vmem:[#allocation5 + $0x18] sm:$0xff] %v64
    // Predicated region
    $region10: #{tpu_custom_call.1} parent=1 // pred_check
      _
    $region11: #{tpu_custom_call.1} parent=1 // pred_check_branch
      %70 = sbr.rel (0) target = $region13
    $region12: #{tpu_custom_call.1} parent=1 // pred_region
      %s72 = ssub.s32 512, 512
      %73 = vsyncadd [#allocation4], %s72
      %s75 = sshll.u32 [#allocation5], 4
      %s76 = int_to_ptr.vmem [resolvable:$true] %s75
      %78 = dma.vmem_to_hbm [thread:$0]  %s76, 512, %s1, [#allocation4]
    $region13: #{tpu_custom_call.1} parent=1 // pred_fallthru
      _
    // Predicated region
    $region14: #{tpu_custom_call.1} parent=1 // pred_check
      _
    $region15: #{tpu_custom_call.1} parent=1 // pred_check_branch
      %80 = sbr.rel (0) target = $region17
    $region16: #{tpu_custom_call.1} parent=1 // pred_region
      %81 = dma.done [#allocation4], 512
    $region17: #{tpu_custom_call.1} parent=1 // pred_fallthru
      _
    %82 = vsyncpa [#allocation3], 1
    %83 = vsyncpa [#allocation4], 1

</llo_original>
